<compile_context>
chip_gen: v5e
topology: v5e:2x2
jax: 0.10.0
libtpu: 0.0.40
codegen_flags: <defaults>
</compile_context>

<pallas_src>
import functools

import jax
import jax.numpy as jnp
from jax.experimental import pallas as pl
from jax.experimental.pallas import tpu as pltpu


def _basic_conv_kernel(x_ref, w_ref, m_ref, b_ref, o_ref, *, kh, kw, W, HW, nb, relu):
    """Conv2d (+bias, +ReLU) for `nb` batch elements per grid step.

    x_ref: (nb, Cin, Lp)       bf16  zero-padded, spatially-flattened input
    w_ref: (Cout, kh*kw*Cin)   bf16  weights, contraction order (i, j, c)
    m_ref: (kw, HW)            bf16  column-validity mask per horizontal tap
    b_ref: (Cout, 1)           f32   bias
    o_ref: (nb, Cout, HW)      f32/bf16  output (flattened NCHW)
    """
    pad_w = kw // 2
    masks = m_ref[...]                                    # (kw, HW) bf16

    # Build the im2col slab directly in bf16 registers (no scratch, no f32
    # round trip).  Each tap (i, j) is a static lane-shifted window of the
    # flattened padded input; row-out-of-range taps read the zero padding and
    # column wrap-around lanes are zeroed by the per-tap masks.
    cols = []
    for b in range(nb):
        xb = x_ref[b]                                     # (Cin, Lp) bf16
        taps = []
        for i in range(kh):
            for j in range(kw):
                s = xb[:, i * W + j: i * W + j + HW]      # (Cin, HW)
                if j != pad_w:                            # dj != 0 -> mask edges
                    s = s * masks[j:j + 1, :]
                taps.append(s)
        cols.append(jnp.concatenate(taps, axis=0))        # (Ktot, HW)
    patches = cols[0] if nb == 1 else jnp.concatenate(cols, axis=1)  # (Ktot, nb*HW)

    # One lane-dense MXU matmul over all nb*HW lanes, f32 accumulation.
    acc = jnp.dot(w_ref[...], patches, preferred_element_type=jnp.float32)
    acc = acc + b_ref[...]                                # (Cout, 1) bcast over lanes
    if relu:
        acc = jnp.maximum(acc, 0.0)

    for b in range(nb):                                   # lane-dense (Cout, HW) stores
        o_ref[b] = acc[:, b * HW:(b + 1) * HW].astype(o_ref.dtype)


def _largest_divisor_leq(n, cap):
    cap = max(1, min(cap, n))
    for d in range(cap, 0, -1):
        if n % d == 0:
            return d
    return 1


def basic_conv(x_nchw, weight_oihw, bias=None, *, stride=1, relu=True,
               out_dtype=jnp.float32):
    """Pallas implementation of BasicConv(in, out, k, stride, bias=True,
    norm=False, relu=True, transpose=False).

    x_nchw:      (N, Cin, H, W)      float32
    weight_oihw: (Cout, Cin, KH, KW) float32
    bias:        (Cout,) or None     float32
    returns:     (N, Cout, Ho, Wo)   out_dtype
    """
    N, Cin, H, W = x_nchw.shape
    Cout, Cin_w, KH, KW = weight_oihw.shape
    assert Cin_w == Cin
    if KH != KW or KH % 2 == 0:
        raise NotImplementedError("only square, odd kernel sizes supported")
    K = KH
    pad = K // 2
    HW = H * W
    P = pad * (W + 1)                 # flattened zero padding on each side
    Lp = HW + 2 * P
    Ktot = K * K * Cin

    if bias is None:
        bias = jnp.zeros((Cout,), jnp.float32)

    # Nb batch elements per grid step: amortize per-step overhead / fill the
    # MXU's 256-wide lane groups, but keep >= 2 "parallel" grid steps whenever
    # N >= 2 so both v7x TensorCores get work.
    nb_target = max(1, 2048 // HW)
    nb_cap = N // 2 if N >= 2 else 1
    Nb = _largest_divisor_leq(N, min(nb_target, nb_cap))
    grid_n = N // Nb

    # ---- wrapper glue: NO activation transposes, only free reshapes + pad ----
    xf = x_nchw.reshape(N, Cin, HW).astype(jnp.bfloat16)
    xf = jnp.pad(xf, ((0, 0), (0, 0), (P, P)))                        # (N, Cin, Lp)
    w2d = jnp.transpose(weight_oihw, (0, 2, 3, 1)).reshape(Cout, Ktot)
    w2d = w2d.astype(jnp.bfloat16)                                    # (Cout, Ktot)
    b2d = bias.reshape(Cout, 1).astype(jnp.float32)

    # Column-validity mask per horizontal tap offset dj = j - pad: a flattened
    # shift wraps row edges, those lanes must be zero (true zero padding).
    wcol = jnp.arange(HW, dtype=jnp.int32) % W
    col_mask = jnp.stack(
        [jnp.logical_and(wcol + (j - pad) >= 0,
                         wcol + (j - pad) < W).astype(jnp.bfloat16)
         for j in range(K)], axis=0)                                  # (K, HW) bf16

    kernel = functools.partial(
        _basic_conv_kernel, kh=K, kw=K, W=W, HW=HW, nb=Nb, relu=relu)

    out_flat = pl.pallas_call(
        kernel,
        out_shape=jax.ShapeDtypeStruct((N, Cout, HW), out_dtype),
        grid_spec=pltpu.PrefetchScalarGridSpec(
            num_scalar_prefetch=0,
            grid=(grid_n,),
            in_specs=[
                pl.BlockSpec((Nb, Cin, Lp), lambda n: (n, 0, 0)),
                pl.BlockSpec((Cout, Ktot), lambda n: (0, 0)),
                pl.BlockSpec((K, HW), lambda n: (0, 0)),
                pl.BlockSpec((Cout, 1), lambda n: (0, 0)),
            ],
            out_specs=pl.BlockSpec((Nb, Cout, HW), lambda n: (n, 0, 0)),
        ),
        compiler_params=pltpu.CompilerParams(
            dimension_semantics=("parallel",),   # batch steps shard over v7x's 2 TCs
            vmem_limit_bytes=32 * 1024 * 1024,
        ),
    )(xf, w2d, col_mask, b2d)

    out = out_flat.reshape(N, Cout, H, W)        # free reshape, already NCHW
    if stride > 1:
        # conv with stride s == subsample of the stride-1 "same" conv (odd k).
        out = out[:, :, ::stride, ::stride]
    return out


if __name__ == "__main__":
    # BasicConv(in_channel=4, out_channel=8, kernel_size=3, stride=1)
    N, Cin, H, W = 2, 4, 16, 16
    Cout, K, stride = 8, 3, 1

    key = jax.random.PRNGKey(0)
    kx, kw_, kb = jax.random.split(key, 3)
    x = jax.random.normal(kx, (N, Cin, H, W), dtype=jnp.float32)
    weight = jax.random.normal(kw_, (Cout, Cin, K, K), dtype=jnp.float32) * 0.1
    bias = jax.random.normal(kb, (Cout,), dtype=jnp.float32) * 0.1

    out = basic_conv(x, weight, bias, stride=stride, relu=True)
    out = jax.block_until_ready(out)

    # Reference with the same bf16-rounded operands (kernel multiplies in bf16,
    # accumulates in f32), so the comparison is tight.
    xr = x.astype(jnp.bfloat16).astype(jnp.float32)
    wr = weight.astype(jnp.bfloat16).astype(jnp.float32)
    ref = jax.lax.conv_general_dilated(
        xr, wr, window_strides=(stride, stride),
        padding=[(K // 2, K // 2), (K // 2, K // 2)],
        dimension_numbers=("NCHW", "OIHW", "NCHW"),
        preferred_element_type=jnp.float32)
    ref = jnp.maximum(ref + bias.reshape(1, Cout, 1, 1), 0.0)

    assert out.shape == ref.shape, (out.shape, ref.shape)
    err = float(jnp.max(jnp.abs(out - ref)))
    assert err < 1e-2, err

    print("KERNEL_OK")
</pallas_src>

<mosaic_0001>
module attributes {stable_mosaic.version = 11 : i64} {
  func.func @_basic_conv_kernel(%arg0: i32, %arg1: memref<1x4x290xbf16, #tpu.memory_space<vmem>>, %arg2: memref<8x36xbf16, #tpu.memory_space<vmem>>, %arg3: memref<3x256xbf16, #tpu.memory_space<vmem>>, %arg4: memref<8x1xf32, #tpu.memory_space<vmem>>, %arg5: memref<1x8x256xf32, #tpu.memory_space<vmem>>) attributes {dimension_semantics = [#tpu.dimension_semantics<parallel>], iteration_bounds = array<i64: 2>, scalar_prefetch = 0 : i64, scratch_operands = 0 : i64, tpu.core_type = #tpu.core_type<tc>, window_params = [{transform_indices = @transform_0, window_bounds = array<i64: 1, 4, 290>}, {pipeline_mode = #tpu.pipeline_mode<synchronous>, transform_indices = @transform_1, window_bounds = array<i64: 8, 36>}, {pipeline_mode = #tpu.pipeline_mode<synchronous>, transform_indices = @transform_2, window_bounds = array<i64: 3, 256>}, {pipeline_mode = #tpu.pipeline_mode<synchronous>, transform_indices = @transform_3, window_bounds = array<i64: 8, 1>}, {transform_indices = @transform_4, window_bounds = array<i64: 1, 8, 256>}]} {
    %c0 = arith.constant 0 : index
    %c0_0 = arith.constant 0 : index
    %0 = vector.load %arg3[%c0, %c0_0] : memref<3x256xbf16, #tpu.memory_space<vmem>>, vector<3x256xbf16>
    %c0_1 = arith.constant 0 : index
    %c0_2 = arith.constant 0 : index
    %c0_3 = arith.constant 0 : index
    %1 = vector.load %arg1[%c0_1, %c0_2, %c0_3] : memref<1x4x290xbf16, #tpu.memory_space<vmem>>, vector<1x4x290xbf16>
    %2 = vector.shape_cast %1 : vector<1x4x290xbf16> to vector<4x290xbf16>
    %3 = vector.extract_strided_slice %2 {offsets = [0, 0], sizes = [4, 256], strides = [1, 1]} : vector<4x290xbf16> to vector<4x256xbf16>
    %4 = vector.extract_strided_slice %0 {offsets = [0, 0], sizes = [1, 256], strides = [1, 1]} : vector<3x256xbf16> to vector<1x256xbf16>
    %5 = vector.broadcast %4 : vector<1x256xbf16> to vector<4x256xbf16>
    %6 = arith.mulf %3, %5 : vector<4x256xbf16>
    %7 = vector.extract_strided_slice %2 {offsets = [0, 1], sizes = [4, 256], strides = [1, 1]} : vector<4x290xbf16> to vector<4x256xbf16>
    %8 = vector.extract_strided_slice %2 {offsets = [0, 2], sizes = [4, 256], strides = [1, 1]} : vector<4x290xbf16> to vector<4x256xbf16>
    %9 = vector.extract_strided_slice %0 {offsets = [2, 0], sizes = [1, 256], strides = [1, 1]} : vector<3x256xbf16> to vector<1x256xbf16>
    %10 = vector.broadcast %9 : vector<1x256xbf16> to vector<4x256xbf16>
    %11 = arith.mulf %8, %10 : vector<4x256xbf16>
    %12 = vector.extract_strided_slice %2 {offsets = [0, 16], sizes = [4, 256], strides = [1, 1]} : vector<4x290xbf16> to vector<4x256xbf16>
    %13 = vector.extract_strided_slice %0 {offsets = [0, 0], sizes = [1, 256], strides = [1, 1]} : vector<3x256xbf16> to vector<1x256xbf16>
    %14 = vector.broadcast %13 : vector<1x256xbf16> to vector<4x256xbf16>
    %15 = arith.mulf %12, %14 : vector<4x256xbf16>
    %16 = vector.extract_strided_slice %2 {offsets = [0, 17], sizes = [4, 256], strides = [1, 1]} : vector<4x290xbf16> to vector<4x256xbf16>
    %17 = vector.extract_strided_slice %2 {offsets = [0, 18], sizes = [4, 256], strides = [1, 1]} : vector<4x290xbf16> to vector<4x256xbf16>
    %18 = vector.extract_strided_slice %0 {offsets = [2, 0], sizes = [1, 256], strides = [1, 1]} : vector<3x256xbf16> to vector<1x256xbf16>
    %19 = vector.broadcast %18 : vector<1x256xbf16> to vector<4x256xbf16>
    %20 = arith.mulf %17, %19 : vector<4x256xbf16>
    %21 = vector.extract_strided_slice %2 {offsets = [0, 32], sizes = [4, 256], strides = [1, 1]} : vector<4x290xbf16> to vector<4x256xbf16>
    %22 = vector.extract_strided_slice %0 {offsets = [0, 0], sizes = [1, 256], strides = [1, 1]} : vector<3x256xbf16> to vector<1x256xbf16>
    %23 = vector.broadcast %22 : vector<1x256xbf16> to vector<4x256xbf16>
    %24 = arith.mulf %21, %23 : vector<4x256xbf16>
    %25 = vector.extract_strided_slice %2 {offsets = [0, 33], sizes = [4, 256], strides = [1, 1]} : vector<4x290xbf16> to vector<4x256xbf16>
    %26 = vector.extract_strided_slice %2 {offsets = [0, 34], sizes = [4, 256], strides = [1, 1]} : vector<4x290xbf16> to vector<4x256xbf16>
    %27 = vector.extract_strided_slice %0 {offsets = [2, 0], sizes = [1, 256], strides = [1, 1]} : vector<3x256xbf16> to vector<1x256xbf16>
    %28 = vector.broadcast %27 : vector<1x256xbf16> to vector<4x256xbf16>
    %29 = arith.mulf %26, %28 : vector<4x256xbf16>
    %30 = tpu.concatenate %6, %7, %11, %15, %16, %20, %24, %25, %29 in 0 : vector<4x256xbf16>, vector<4x256xbf16>, vector<4x256xbf16>, vector<4x256xbf16>, vector<4x256xbf16>, vector<4x256xbf16>, vector<4x256xbf16>, vector<4x256xbf16>, vector<4x256xbf16> -> vector<36x256xbf16>
    %c0_4 = arith.constant 0 : index
    %c0_5 = arith.constant 0 : index
    %31 = vector.load %arg2[%c0_4, %c0_5] : memref<8x36xbf16, #tpu.memory_space<vmem>>, vector<8x36xbf16>
    %cst = arith.constant dense<0.000000e+00> : vector<8x256xf32>
    %32 = tpu.matmul %31, %30, %cst {dimension_numbers = #tpu.dot_dimension_numbers<[1], [0], [0], [1], [0, 0, 1, 1], [], []>} : vector<8x36xbf16>, vector<36x256xbf16>, vector<8x256xf32> -> vector<8x256xf32>
    %c0_6 = arith.constant 0 : index
    %c0_7 = arith.constant 0 : index
    %33 = vector.load %arg4[%c0_6, %c0_7] : memref<8x1xf32, #tpu.memory_space<vmem>>, vector<8x1xf32>
    %34 = vector.broadcast %33 : vector<8x1xf32> to vector<8x256xf32>
    %35 = arith.addf %32, %34 : vector<8x256xf32>
    %cst_8 = arith.constant 0.000000e+00 : f32
    %36 = vector.broadcast %cst_8 : f32 to vector<8x256xf32>
    %37 = arith.maximumf %35, %36 : vector<8x256xf32>
    %c0_9 = arith.constant 0 : index
    %c0_10 = arith.constant 0 : index
    %c0_11 = arith.constant 0 : index
    %38 = vector.load %arg5[%c0_9, %c0_10, %c0_11] : memref<1x8x256xf32, #tpu.memory_space<vmem>>, vector<1x8x256xf32>
    %39 = vector.shape_cast %38 : vector<1x8x256xf32> to vector<8x256xf32>
    %40 = vector.shape_cast %37 : vector<8x256xf32> to vector<1x8x256xf32>
    tpu.vector_store %arg5[%c0_9, %c0_10, %c0_11], %40 {strides = array<i32>} : memref<1x8x256xf32, #tpu.memory_space<vmem>>, vector<1x8x256xf32>,
    return
  }
  func.func @transform_0(%arg0: i32) -> (i32, i32, i32) {
    %c0_i32 = arith.constant 0 : i32
    %c0_i32_0 = arith.constant 0 : i32
    %c0_i32_1 = arith.constant 0 : i32
    return %arg0, %c0_i32, %c0_i32_0 : i32, i32, i32
  }
  func.func @transform_1(%arg0: i32) -> (i32, i32) {
    %c0_i32 = arith.constant 0 : i32
    %c0_i32_0 = arith.constant 0 : i32
    %c0_i32_1 = arith.constant 0 : i32
    return %c0_i32, %c0_i32_0 : i32, i32
  }
  func.func @transform_2(%arg0: i32) -> (i32, i32) {
    %c0_i32 = arith.constant 0 : i32
    %c0_i32_0 = arith.constant 0 : i32
    %c0_i32_1 = arith.constant 0 : i32
    return %c0_i32, %c0_i32_0 : i32, i32
  }
  func.func @transform_3(%arg0: i32) -> (i32, i32) {
    %c0_i32 = arith.constant 0 : i32
    %c0_i32_0 = arith.constant 0 : i32
    %c0_i32_1 = arith.constant 0 : i32
    return %c0_i32, %c0_i32_0 : i32, i32
  }
  func.func @transform_4(%arg0: i32) -> (i32, i32, i32) {
    %c0_i32 = arith.constant 0 : i32
    %c0_i32_0 = arith.constant 0 : i32
    %c0_i32_1 = arith.constant 0 : i32
    return %arg0, %c0_i32, %c0_i32_0 : i32, i32, i32
  }
}

</mosaic_0001>

<llo_original>
// kernel: tpu_custom_call.1
$region0: #{tpu_custom_call.1}
  #allocation0 [shape = 'u32[]', space=smem, size = 0x4, offset = 0x4, fixed_abs, tag = 'smem constant byte address 0x4 - core index']
  #allocation1 [shape = 'u32[72,128]{1,0:T(1,128)}', space=vmem, size = 0x9000, scoped, tag = 'internal scratch']
  %s0 = inlined_call_operand.hbm [shape: bf16[2,4,290], index: 0, kind: input, shape index: {}]
  %s1 = inlined_call_operand.vmem [shape: bf16[8,36], index: 1, kind: input, shape index: {}]
  %s2 = inlined_call_operand.vmem [shape: bf16[3,256], index: 2, kind: input, shape index: {}]
  %s3 = inlined_call_operand.vmem [shape: f32[8,1], index: 3, kind: input, shape index: {}]
  %s4 = inlined_call_operand.hbm [shape: f32[2,8,256], index: 4, kind: output, shape index: {}]
  %s5 = sld [smem:[#allocation0]]
  $region53: #{tpu_custom_call.1} parent=0
    _
  %s7 = ssub.s32 1, %s5
  %s8 = scalar_select 0, %s7, %s5
  $region1: #{tpu_custom_call.1} parent=0
    #allocation2 [shape = 'u8[6144]{0}', space=vmem, size = 0x1800, scoped, tag = 'input window, operand 0']
    #allocation3 [shape = 's32[2]{0}', space=sflag, size = 0x8, scoped, tag = 'scoped memory for tpu_custom_call.1']
    #allocation4 [shape = 's32[2]{0}', space=sflag, size = 0x8, scoped, tag = 'scoped memory for tpu_custom_call.1']
    #allocation5 [shape = 'u8[16384]{0}', space=vmem, size = 0x4000, scoped, tag = 'output window, operand 0']
    %9 = vsyncpa [#allocation3], 0
    %s10 = scalar_lea.sflag [#allocation3], 1
    %11 = vsyncpa %s10, 0
    %12 = vsyncpa [#allocation4], 0
    %s13 = scalar_lea.sflag [#allocation4], 1
    %14 = vsyncpa %s13, 0
    loop: start=0, step=1, limit=4
    $region2: #{tpu_custom_call.1} parent=1 // loop_pre_header
      _
    $region3: #{tpu_custom_call.1} parent=1 // loop_header
      %s16 = sphi 0, %s20
      %p17 = scmp.ge.s32.totalorder %s16, 4
      %s26 = sphi 0, %s28
      %s29 = sphi 0, %s26
      %s30 = sphi 0, %s29
      %s46 = sphi 0, %s30
      %s50 = sphi 0, %s50
      %s52 = sphi 0, %s50
      %s53 = sphi 0, %s52
      %s67 = sphi 0, %s53
      %s71 = sphi 0, %s71
      %s73 = sphi 0, %s71
      %s74 = sphi 0, %s73
      %s88 = sphi 0, %s74
      %s92 = sphi 0, %s92
      %s94 = sphi 0, %s92
      %s95 = sphi 0, %s94
      %s109 = sphi 0, %s95
      %s115 = sphi 0, %s117
      %s118 = sphi 0, %s115
      %s119 = sphi 0, %s118
      %s135 = sphi 0, %s119
    $region4: #{tpu_custom_call.1} parent=1 // loop_header_branch
      %19 = sbr.rel (%p17) target = $region8
    $region5: #{tpu_custom_call.1} parent=1 // loop_body
      %s21 = ssub.s32 %s16, 1
      %s22 = ssub.s32 %s16, 2
      %s23 = sadd.s32 %s16, 1
      %s24 = ssub.s32 %s16, %s23
      %p25 = scmp.eq.s32.totalorder %s24, 0
      %s27 = sadd.s32 %s26, 1
      %s28 = scalar_select %p25, %s26, %s27
      %p31 = pneg %p25
      %p32 = scmp.eq.s32.totalorder %s16, 1
      %p33 = por %p31, %p32
      %p34 = scmp.ne.s32.totalorder %s26, %s29
      %p35 = scmp.eq.s32.totalorder %s16, 0
      %p36 = por %p34, %p35
      %p37 = scmp.ne.s32.totalorder %s26, %s29
      %p38 = scmp.eq.s32.totalorder %s21, 1
      %p39 = por %p37, %p38
      %p40 = scmp.ne.s32.totalorder %s29, %s30
      %p41 = scmp.eq.s32.totalorder %s21, 0
      %p42 = por %p40, %p41
      %p43 = scmp.ne.s32.totalorder %s29, %s30
      %p44 = scmp.eq.s32.totalorder %s22, 1
      %p45 = por %p43, %p44
      %p47 = scmp.ne.s32.totalorder %s30, %s46
      %p48 = scmp.eq.s32.totalorder %s22, 0
      %p49 = por %p47, %p48
      %s51 = sadd.s32 %s50, 1
      %p54 = scmp.eq.s32.totalorder %s16, 1
      %p55 = scmp.ne.s32.totalorder %s50, %s52
      %p56 = scmp.eq.s32.totalorder %s16, 0
      %p57 = por %p55, %p56
      %p58 = scmp.ne.s32.totalorder %s50, %s52
      %p59 = scmp.eq.s32.totalorder %s21, 1
      %p60 = por %p58, %p59
      %p61 = scmp.ne.s32.totalorder %s52, %s53
      %p62 = scmp.eq.s32.totalorder %s21, 0
      %p63 = por %p61, %p62
      %p64 = scmp.ne.s32.totalorder %s52, %s53
      %p65 = scmp.eq.s32.totalorder %s22, 1
      %p66 = por %p64, %p65
      %p68 = scmp.ne.s32.totalorder %s53, %s67
      %p69 = scmp.eq.s32.totalorder %s22, 0
      %p70 = por %p68, %p69
      %s72 = sadd.s32 %s71, 1
      %p75 = scmp.eq.s32.totalorder %s16, 1
      %p76 = scmp.ne.s32.totalorder %s71, %s73
      %p77 = scmp.eq.s32.totalorder %s16, 0
      %p78 = por %p76, %p77
      %p79 = scmp.ne.s32.totalorder %s71, %s73
      %p80 = scmp.eq.s32.totalorder %s21, 1
      %p81 = por %p79, %p80
      %p82 = scmp.ne.s32.totalorder %s73, %s74
      %p83 = scmp.eq.s32.totalorder %s21, 0
      %p84 = por %p82, %p83
      %p85 = scmp.ne.s32.totalorder %s73, %s74
      %p86 = scmp.eq.s32.totalorder %s22, 1
      %p87 = por %p85, %p86
      %p89 = scmp.ne.s32.totalorder %s74, %s88
      %p90 = scmp.eq.s32.totalorder %s22, 0
      %p91 = por %p89, %p90
      %s93 = sadd.s32 %s92, 1
      %p96 = scmp.eq.s32.totalorder %s16, 1
      %p97 = scmp.ne.s32.totalorder %s92, %s94
      %p98 = scmp.eq.s32.totalorder %s16, 0
      %p99 = por %p97, %p98
      %p100 = scmp.ne.s32.totalorder %s92, %s94
      %p101 = scmp.eq.s32.totalorder %s21, 1
      %p102 = por %p100, %p101
      %p103 = scmp.ne.s32.totalorder %s94, %s95
      %p104 = scmp.eq.s32.totalorder %s21, 0
      %p105 = por %p103, %p104
      %p106 = scmp.ne.s32.totalorder %s94, %s95
      %p107 = scmp.eq.s32.totalorder %s22, 1
      %p108 = por %p106, %p107
      %p110 = scmp.ne.s32.totalorder %s95, %s109
      %p111 = scmp.eq.s32.totalorder %s22, 0
      %p112 = por %p110, %p111
      %s113 = ssub.s32 %s16, %s23
      %p114 = scmp.eq.s32.totalorder %s113, 0
      %s116 = sadd.s32 %s115, 1
      %s117 = scalar_select %p114, %s115, %s116
      %p120 = pneg %p114
      %p121 = scmp.eq.s32.totalorder %s16, 1
      %p122 = por %p120, %p121
      %p123 = scmp.ne.s32.totalorder %s115, %s118
      %p124 = scmp.eq.s32.totalorder %s16, 0
      %p125 = por %p123, %p124
      %p126 = scmp.ne.s32.totalorder %s115, %s118
      %p127 = scmp.eq.s32.totalorder %s21, 1
      %p128 = por %p126, %p127
      %p129 = scmp.ne.s32.totalorder %s118, %s119
      %p130 = scmp.eq.s32.totalorder %s21, 0
      %p131 = por %p129, %p130
      %p132 = scmp.ne.s32.totalorder %s118, %s119
      %p133 = scmp.eq.s32.totalorder %s22, 1
      %p134 = por %p132, %p133
      %p136 = scmp.ne.s32.totalorder %s119, %s135
      %p137 = scmp.eq.s32.totalorder %s22, 0
      %p138 = por %p136, %p137
      %p139 = scmp.le.s32.totalorder 1, %s16
      %p140 = scmp.lt.s32.totalorder %s16, 3
      %p141 = pnand %p139, %p140
      %p142 = pneg %p141
      // Predicated region
      $region9: #{tpu_custom_call.1} parent=5 // pred_check
        _
      $region10: #{tpu_custom_call.1} parent=5 // pred_check_branch
        %144 = sbr.rel (%p141) target = $region12
      $region11: #{tpu_custom_call.1} parent=5 // pred_region
        %s145 = ssub.s32 %s16, 1
        // Predicated region
        $region13: #{tpu_custom_call.1} parent=11 // pred_check
          %p146 = pneg %p63
        $region14: #{tpu_custom_call.1} parent=11 // pred_check_branch
          %148 = sbr.rel (%p146) target = $region16
        $region15: #{tpu_custom_call.1} parent=11 // pred_region
          _
        $region16: #{tpu_custom_call.1} parent=11 // pred_fallthru
          _
        // Predicated region
        $region17: #{tpu_custom_call.1} parent=11 // pred_check
          %p149 = pneg %p84
        $region18: #{tpu_custom_call.1} parent=11 // pred_check_branch
          %151 = sbr.rel (%p149) target = $region20
        $region19: #{tpu_custom_call.1} parent=11 // pred_region
          _
        $region20: #{tpu_custom_call.1} parent=11 // pred_fallthru
          _
        // Predicated region
        $region21: #{tpu_custom_call.1} parent=11 // pred_check
          %p152 = pneg %p105
        $region22: #{tpu_custom_call.1} parent=11 // pred_check_branch
          %154 = sbr.rel (%p152) target = $region24
        $region23: #{tpu_custom_call.1} parent=11 // pred_region
          _
        $region24: #{tpu_custom_call.1} parent=11 // pred_fallthru
          _
      $region12: #{tpu_custom_call.1} parent=5 // pred_fallthru
        _
      %p155 = scmp.lt.s32.totalorder %s16, 2
      // Predicated region
      $region25: #{tpu_custom_call.1} parent=5 // pred_check
        %p156 = pneg %p155
      $region26: #{tpu_custom_call.1} parent=5 // pred_check_branch
        %158 = sbr.rel (%p156) target = $region28
      $region27: #{tpu_custom_call.1} parent=5 // pred_region
        // Predicated region
        $region29: #{tpu_custom_call.1} parent=27 // pred_check
          %p159 = pneg %p36
        $region30: #{tpu_custom_call.1} parent=27 // pred_check_branch
          %161 = sbr.rel (%p159) target = $region32
        $region31: #{tpu_custom_call.1} parent=27 // pred_region
          %s162 = sand.u32 %s26, 1
          %s163 = scalar_lea.sflag [#allocation3], %s162
          %s164 = sand.u32 %s26, 1
          %s165 = smul.addr %s164, 6
          %s166 = scalar_lea.vmem [#allocation2], %s165
          %168 = vsyncadd %s163, 0
          %s169 = smul.addr %s16, 3
          %s170 = smul.addr %s169, 2
          %s171 = scalar_lea.hbm %s0, %s170
          %s173 = sshll.u32 %s171, 4
          %s174 = int_to_ptr.hbm [resolvable:$true] %s173
          %s175 = sshll.u32 %s166, 4
          %s176 = int_to_ptr.vmem [resolvable:$true] %s175
          %178 = dma.hbm_to_vmem [thread:$0]  %s174, 96, %s176, %s163
        $region32: #{tpu_custom_call.1} parent=27 // pred_fallthru
          _
      $region28: #{tpu_custom_call.1} parent=5 // pred_fallthru
        _
      %p179 = scmp.le.s32.totalorder 1, %s16
      %p180 = scmp.lt.s32.totalorder %s16, 3
      %p181 = pnand %p179, %p180
      %p182 = pneg %p181
      // Predicated region
      $region33: #{tpu_custom_call.1} parent=5 // pred_check
        _
      $region34: #{tpu_custom_call.1} parent=5 // pred_check_branch
        %184 = sbr.rel (%p181) target = $region36
      $region35: #{tpu_custom_call.1} parent=5 // pred_region
        %s185 = ssub.s32 %s16, 1
        %s186 = sand.u32 %s29, 1
        %s187 = scalar_lea.sflag [#allocation3], %s186
        %s188 = sand.u32 %s29, 1
        %s189 = smul.addr %s188, 6
        %s190 = scalar_lea.vmem [#allocation2], %s189
        // Predicated region
        $region37: #{tpu_custom_call.1} parent=35 // pred_check
          %p191 = pneg %p42
        $region38: #{tpu_custom_call.1} parent=35 // pred_check_branch
          %193 = sbr.rel (%p191) target = $region40
        $region39: #{tpu_custom_call.1} parent=35 // pred_region
          %195 = dma.done %s187, 96
        $region40: #{tpu_custom_call.1} parent=35 // pred_fallthru
          _
        %s196 = sand.u32 %s29, 1
        %s197 = scalar_lea.sflag [#allocation3], %s196
        %s198 = sand.u32 %s29, 1
        %s199 = smul.addr %s198, 6
        %s200 = scalar_lea.vmem [#allocation2], %s199
        %p201 = pneg %p42
        %p202 = pneg %p39
        %p203 = pneg %p63
        %p204 = pneg %p60
        %p205 = pneg %p84
        %p206 = pneg %p81
        %p207 = pneg %p105
        %p208 = pneg %p102
        %p209 = pneg %p131
        %p210 = pneg %p128
        %s211 = sand.u32 %s118, 1
        %s212 = scalar_lea.sflag [#allocation4], %s211
        %s213 = sand.u32 %s118, 1
        %s214 = smul.addr %s213, 16
        %s215 = scalar_lea.vmem [#allocation5], %s214
        %v217 = vld [vmem:[%s2] sm:$0xf]
        %v218 = vld [vmem:[%s190] sm:$0x3f]
        %220 = vst [vmem:[#allocation1] ss:$4 sm:$0xff] %v217
        %v221 = vld.sshfl [vmem:[#allocation1] sm:$0xff pattern:$0x73625140]
        %v222 = vld.sshfl [vmem:[#allocation1 + $0x8] sm:$0xff pattern:$0x73625140]
        %v223 = vpack.i.b16 %v221, %v221
        %v225 = vperm.slane %v223, 0
        %v226 = vpack.i.b16 %v222, %v222
        %v228 = vperm.slane %v226, 0
        %v229 = vunpack.c.l.bf16 %v218
        %v230 = vunpack.c.l.bf16 %v225
        %v231 = vunpack.c.l.bf16 %v228
        %v234 = vrot.slane %v231, 4
        %vm235 = vcmask 1043456
        %v236 = vsel %vm235, %v230, %v234
        %v238 = vmul.f32 %v229, %v236
        %240 = vst [vmem:[#allocation1] ss:$2 sm:$0xff] %v238
        %v241 = vld.sshfl [vmem:[#allocation1] sm:$0xff pattern:$0x75316420]
        %v242 = vld.sshfl [vmem:[#allocation1 + $0x8] sm:$0xff pattern:$0x75316420]
        %v245 = vpack.c.bf16 %v242, %v241
        %246 = vst [vmem:[#allocation1] ss:$4 sm:$0xff] %v217
        %v247 = vld.sshfl [vmem:[#allocation1] sm:$0xff pattern:$0x73625140]
        %v248 = vld.sshfl [vmem:[#allocation1 + $0x8] sm:$0xff pattern:$0x73625140]
        %v249 = vpack.i.b16 %v247, %v247
        %v251 = vperm.slane %v249, 1
        %v252 = vpack.i.b16 %v248, %v248
        %v254 = vperm.slane %v252, 1
        %v255 = vunpack.c.h.bf16 %v218
        %v256 = vunpack.c.l.bf16 %v251
        %v257 = vunpack.c.l.bf16 %v254
        %v260 = vrot.slane %v257, 4
        %v261 = vsel %vm235, %v256, %v260
        %262 = vrot.lane.b32.xlu0 %v261, 2
        %v263 = vpop.permute.xlu0 %262
        %v264 = vrot.slane %v263, 4
        %vm265 = vcmask 15360
        %v266 = vsel %vm265, %v264, %v263
        %v269 = vmul.f32 %v229, %v266
        %v270 = vmul.f32 %v255, %v264
        %273 = vst [vmem:[#allocation1] ss:$2 sm:$0xff] %v269
        %s274 = scalar_lea.vmem [#allocation1], 16
        %275 = vst [vmem:[%s274] ss:$2 sm:$0xff] %v270
        %v276 = vld.sshfl [vmem:[#allocation1] sm:$0xff pattern:$0x75316420]
        %v277 = vld.sshfl [vmem:[#allocation1 + $0x8] sm:$0xff pattern:$0x75316420]
        %v278 = vld.sshfl [vmem:[#allocation1 + $0x10] sm:$0xff pattern:$0x75316420]
        %v282 = vpack.c.bf16 %v277, %v276
        %v283 = vpack.c.bf16 %v278, %v278
        %284 = vrot.lane.b32.xlu0 %v236, 16
        %v285 = vpop.permute.xlu0 %284
        %v286 = vrot.slane %v285, 4
        %vm287 = vcmask 130048
        %v288 = vsel %vm287, %v286, %v285
        %v291 = vmul.f32 %v229, %v288
        %v292 = vmul.f32 %v255, %v286
        %295 = vst [vmem:[#allocation1] ss:$2 sm:$0xff] %v291
        %s296 = scalar_lea.vmem [#allocation1], 16
        %297 = vst [vmem:[%s296] ss:$2 sm:$0xff] %v292
        %v298 = vld.sshfl [vmem:[#allocation1] sm:$0xff pattern:$0x75316420]
        %v299 = vld.sshfl [vmem:[#allocation1 + $0x8] sm:$0xff pattern:$0x75316420]
        %v300 = vld.sshfl [vmem:[#allocation1 + $0x10] sm:$0xff pattern:$0x75316420]
        %v304 = vpack.c.bf16 %v299, %v298
        %v305 = vpack.c.bf16 %v300, %v300
        %306 = vrot.lane.b32.xlu0 %v261, 18
        %v307 = vpop.permute.xlu0 %306
        %v308 = vrot.slane %v307, 4
        %vm309 = vcmask 146432
        %v310 = vsel %vm309, %v308, %v307
        %v313 = vmul.f32 %v229, %v310
        %v314 = vmul.f32 %v255, %v308
        %317 = vst [vmem:[#allocation1] ss:$2 sm:$0xff] %v313
        %s318 = scalar_lea.vmem [#allocation1], 16
        %319 = vst [vmem:[%s318] ss:$2 sm:$0xff] %v314
        %v320 = vld.sshfl [vmem:[#allocation1] sm:$0xff pattern:$0x75316420]
        %v321 = vld.sshfl [vmem:[#allocation1 + $0x8] sm:$0xff pattern:$0x75316420]
        %v322 = vld.sshfl [vmem:[#allocation1 + $0x10] sm:$0xff pattern:$0x75316420]
        %v326 = vpack.c.bf16 %v321, %v320
        %v327 = vpack.c.bf16 %v322, %v322
        %328 = vrot.lane.b32.xlu0 %v236, 32
        %v329 = vpop.permute.xlu0 %328
        %v330 = vrot.slane %v329, 4
        %vm331 = vcmask 261120
        %v332 = vsel %vm331, %v330, %v329
        %v335 = vmul.f32 %v229, %v332
        %v336 = vmul.f32 %v255, %v330
        %339 = vst [vmem:[#allocation1] ss:$2 sm:$0xff] %v335
        %s340 = scalar_lea.vmem [#allocation1], 16
        %341 = vst [vmem:[%s340] ss:$2 sm:$0xff] %v336
        %v342 = vld.sshfl [vmem:[#allocation1] sm:$0xff pattern:$0x75316420]
        %v343 = vld.sshfl [vmem:[#allocation1 + $0x8] sm:$0xff pattern:$0x75316420]
        %v344 = vld.sshfl [vmem:[#allocation1 + $0x10] sm:$0xff pattern:$0x75316420]
        %v348 = vpack.c.bf16 %v343, %v342
        %v349 = vpack.c.bf16 %v344, %v344
        %350 = vrot.lane.b32.xlu0 %v261, 34
        %v351 = vpop.permute.xlu0 %350
        %v352 = vrot.slane %v351, 4
        %vm353 = vcmask 277504
        %v354 = vsel %vm353, %v352, %v351
        %v357 = vmul.f32 %v229, %v354
        %v358 = vmul.f32 %v255, %v352
        %361 = vst [vmem:[#allocation1] ss:$2 sm:$0xff] %v357
        %s362 = scalar_lea.vmem [#allocation1], 16
        %363 = vst [vmem:[%s362] ss:$2 sm:$0xff] %v358
        %v364 = vld.sshfl [vmem:[#allocation1] sm:$0xff pattern:$0x75316420]
        %v365 = vld.sshfl [vmem:[#allocation1 + $0x8] sm:$0xff pattern:$0x75316420]
        %v366 = vld.sshfl [vmem:[#allocation1 + $0x10] sm:$0xff pattern:$0x75316420]
        %v370 = vpack.c.bf16 %v365, %v364
        %v371 = vpack.c.bf16 %v366, %v366
        %v373 = vunpack.c.l.b16 %v245
        %v374 = vunpack.c.h.b16 %v245
        %v375 = vpack.c.b16 %v373, %v373
        %v376 = vpack.c.b16 %v374, %v374
        %s378 = scalar_lea.vmem [#allocation1], 1
        %379 = vst [vmem:[%s378] ss:$4 sm:$0xff] %v218
        %v380 = vld.sshfl [vmem:[#allocation1] sm:$0xff pattern:$0x73625140]
        %v382 = vld.sshfl [vmem:[#allocation1 + $0x8] sm:$0xff pattern:$0x73625140]
        %v384 = vld.sshfl [vmem:[#allocation1 + $0x10] sm:$0xff pattern:$0x73625140]
        %386 = vrot.lane.b32.xlu0 %v380, 127
        %v387 = vpop.permute.xlu0 %386
        %388 = vrot.lane.b32.xlu0 %v382, 127
        %v389 = vpop.permute.xlu0 %388
        %390 = vrot.lane.b32.xlu0 %v384, 127
        %v391 = vpop.permute.xlu0 %390
        %vm392 = vcmask 1039360
        %v393 = vsel %vm392, %v387, %v389
        %v394 = vsel %vm392, %v389, %v391
        %v397 = vunpack.c.l.b16 %v282
        %v398 = vunpack.c.h.b16 %v282
        %v399 = vunpack.c.l.b16 %v283
        %v400 = vpack.c.b16 %v397, %v397
        %v401 = vpack.c.b16 %v398, %v398
        %v402 = vpack.c.b16 %v399, %v399
        %403 = vrot.lane.b32.xlu0 %v400, 126
        %v404 = vpop.permute.xlu0 %403
        %405 = vrot.lane.b32.xlu0 %v401, 126
        %v406 = vpop.permute.xlu0 %405
        %407 = vrot.lane.b32.xlu0 %v402, 126
        %v408 = vpop.permute.xlu0 %407
        %vm409 = vcmask 1031168
        %v410 = vsel %vm409, %v404, %v406
        %v411 = vsel %vm409, %v406, %v408
        %v414 = vunpack.c.l.b16 %v304
        %v415 = vunpack.c.h.b16 %v304
        %v416 = vunpack.c.l.b16 %v305
        %v417 = vpack.c.b16 %v414, %v414
        %v418 = vpack.c.b16 %v415, %v415
        %v419 = vpack.c.b16 %v416, %v416
        %v420 = vrot.slane %v417, 2
        %v421 = vrot.slane %v418, 2
        %v422 = vrot.slane %v419, 2
        %423 = vrot.lane.b32.xlu0 %v420, 112
        %v424 = vpop.permute.xlu0 %423
        %425 = vrot.lane.b32.xlu0 %v421, 112
        %v426 = vpop.permute.xlu0 %425
        %427 = vrot.lane.b32.xlu0 %v422, 112
        %v428 = vpop.permute.xlu0 %427
        %vm429 = vcmask 916480
        %v430 = vsel %vm429, %v424, %v426
        %v431 = vsel %vm429, %v426, %v428
        %432 = vst [vmem:[#allocation1] ss:$4 sm:$0xff] %v218
        %v433 = vld.sshfl [vmem:[#allocation1] sm:$0xff pattern:$0x73625140]
        %v435 = vld.sshfl [vmem:[#allocation1 + $0x8] sm:$0xff pattern:$0x73625140]
        %v437 = vld.sshfl [vmem:[#allocation1 + $0x10] sm:$0xff pattern:$0x73625140]
        %439 = vrot.lane.b32.xlu0 %v433, 111
        %v440 = vpop.permute.xlu0 %439
        %441 = vrot.lane.b32.xlu0 %v435, 111
        %v442 = vpop.permute.xlu0 %441
        %443 = vrot.lane.b32.xlu0 %v437, 111
        %v444 = vpop.permute.xlu0 %443
        %vm445 = vcmask 908288
        %v446 = vsel %vm445, %v440, %v442
        %v447 = vsel %vm445, %v442, %v444
        %v450 = vunpack.c.l.b16 %v326
        %v451 = vunpack.c.h.b16 %v326
        %v452 = vunpack.c.l.b16 %v327
        %v453 = vpack.c.b16 %v450, %v450
        %v454 = vpack.c.b16 %v451, %v451
        %v455 = vpack.c.b16 %v452, %v452
        %v456 = vrot.slane %v453, 6
        %v457 = vrot.slane %v454, 6
        %v458 = vrot.slane %v455, 6
        %459 = vrot.lane.b32.xlu0 %v456, 110
        %v460 = vpop.permute.xlu0 %459
        %461 = vrot.lane.b32.xlu0 %v457, 110
        %v462 = vpop.permute.xlu0 %461
        %463 = vrot.lane.b32.xlu0 %v458, 110
        %v464 = vpop.permute.xlu0 %463
        %vm465 = vcmask 900096
        %v466 = vsel %vm465, %v460, %v462
        %v467 = vsel %vm465, %v462, %v464
        %v470 = vunpack.c.l.b16 %v348
        %v471 = vunpack.c.h.b16 %v348
        %v472 = vunpack.c.l.b16 %v349
        %v473 = vpack.c.b16 %v470, %v470
        %v474 = vpack.c.b16 %v471, %v471
        %v475 = vpack.c.b16 %v472, %v472
        %476 = vrot.lane.b32.xlu0 %v473, 96
        %v477 = vpop.permute.xlu0 %476
        %478 = vrot.lane.b32.xlu0 %v474, 96
        %v479 = vpop.permute.xlu0 %478
        %480 = vrot.lane.b32.xlu0 %v475, 96
        %v481 = vpop.permute.xlu0 %480
        %vm482 = vcmask 785408
        %v483 = vsel %vm482, %v477, %v479
        %v484 = vsel %vm482, %v479, %v481
        %s485 = scalar_lea.vmem [#allocation1], 3
        %486 = vst [vmem:[%s485] ss:$4 sm:$0xff] %v218
        %v487 = vld.sshfl [vmem:[#allocation1] sm:$0xff pattern:$0x73625140]
        %v489 = vld.sshfl [vmem:[#allocation1 + $0x8] sm:$0xff pattern:$0x73625140]
        %v491 = vld.sshfl [vmem:[#allocation1 + $0x10] sm:$0xff pattern:$0x73625140]
        %493 = vrot.lane.b32.xlu0 %v487, 95
        %v494 = vpop.permute.xlu0 %493
        %495 = vrot.lane.b32.xlu0 %v489, 95
        %v496 = vpop.permute.xlu0 %495
        %497 = vrot.lane.b32.xlu0 %v491, 95
        %v498 = vpop.permute.xlu0 %497
        %vm499 = vcmask 777216
        %v500 = vsel %vm499, %v494, %v496
        %v501 = vsel %vm499, %v496, %v498
        %v504 = vunpack.c.l.b16 %v370
        %v505 = vunpack.c.h.b16 %v370
        %v506 = vunpack.c.l.b16 %v371
        %v507 = vpack.c.b16 %v504, %v504
        %v508 = vpack.c.b16 %v505, %v505
        %v509 = vpack.c.b16 %v506, %v506
        %510 = vrot.lane.b32.xlu0 %v507, 94
        %v511 = vpop.permute.xlu0 %510
        %512 = vrot.lane.b32.xlu0 %v508, 94
        %v513 = vpop.permute.xlu0 %512
        %514 = vrot.lane.b32.xlu0 %v509, 94
        %v515 = vpop.permute.xlu0 %514
        %vm516 = vcmask 769024
        %v517 = vsel %vm516, %v511, %v513
        %v518 = vsel %vm516, %v513, %v515
        %vm519 = vcmask 1041408
        %v522 = vsel %vm519, %v375, %v393
        %v525 = vsel %vm519, %v376, %v394
        %v527 = vsel %vm235, %v522, %v410
        %v529 = vsel %vm235, %v525, %v411
        %vm530 = vcmask 1045504
        %v532 = vsel %vm530, %v527, %v430
        %v535 = vsel %vm530, %v529, %v431
        %v539 = vsel %vm519, %v446, %v466
        %v542 = vsel %vm519, %v447, %v467
        %v544 = vsel %vm235, %v539, %v483
        %v546 = vsel %vm235, %v542, %v484
        %v548 = vsel %vm530, %v544, %v500
        %v551 = vsel %vm530, %v546, %v501
        %v553 = vld [vmem:[%s1] sm:$0xf]
        %v554 = vld [vmem:[%s3] sm:$0xff]
        %556 = vset.pattern.permute.xlu0 0
        %557 = vperm.xlu0 %556, %v554
        %v558 = vpop.permute.xlu0 %557
        %vm560 = vcmask 293888
        %v562 = vsel %vm560, %v553, 0
        %v565 = vsel %vm519, %v517, 0
        %v568 = vsel %vm519, %v518, 0
        %570 = vmatpush.bf16.msra.mxu0 0
        %571 = vmatpush.bf16.msra.mxu0 0
        %572 = vmatpush.bf16.msra.mxu0 0
        %573 = vmatpush.bf16.msra.mxu0 0
        %574 = vmatpush.bf16.msra.mxu0 0
        %575 = vmatpush.bf16.msra.mxu0 %v565
        %576 = vmatpush.bf16.msra.mxu0 %v548
        %577 = vmatpush.bf16.msra.mxu0 %v532
        %578 = vmatmul.bf16.gmra.mxu0 %v562
        %v579 = vpop.f32.mrf.mxu0
        %v580 = vadd.f32 %v558, %v579
        %v581 = vpop.f32.mrf.mxu0
        %582 = vdwg.mxu0
        %583 = vmatpush.bf16.msra.mxu0 0
        %584 = vmatpush.bf16.msra.mxu0 0
        %585 = vmatpush.bf16.msra.mxu0 0
        %586 = vmatpush.bf16.msra.mxu0 0
        %587 = vmatpush.bf16.msra.mxu0 0
        %588 = vmatpush.bf16.msra.mxu0 %v568
        %589 = vmatpush.bf16.msra.mxu0 %v551
        %590 = vmatpush.bf16.msra.mxu0 %v535
        %591 = vmatmul.bf16.gmra.mxu0 %v562
        %v592 = vpop.f32.mrf.mxu0
        %v593 = vadd.f32 %v558, %v592
        %v594 = vpop.f32.mrf.mxu0
        %595 = vdwg.mxu0
        %v596 = vmax.f32 %v580, 0.0
        %v597 = vmax.f32 %v593, 0.0
        %598 = vst [vmem:[%s215] sm:$0xff] %v596
        %599 = vst [vmem:[%s215 + $0x8] sm:$0xff] %v597
        %s600 = sand.u32 %s118, 1
        %s601 = scalar_lea.sflag [#allocation4], %s600
        %s602 = sand.u32 %s118, 1
        %s603 = smul.addr %s602, 16
        %s604 = scalar_lea.vmem [#allocation5], %s603
        // Predicated region
        $region41: #{tpu_custom_call.1} parent=35 // pred_check
          %p605 = pneg %p128
        $region42: #{tpu_custom_call.1} parent=35 // pred_check_branch
          %607 = sbr.rel (%p605) target = $region44
        $region43: #{tpu_custom_call.1} parent=35 // pred_region
          %609 = vsyncadd %s601, 0
          %s610 = smul.addr %s21, 2
          %s611 = smul.addr %s610, 8
          %s612 = scalar_lea.hbm %s4, %s611
          %s614 = sshll.u32 %s604, 4
          %s615 = int_to_ptr.vmem [resolvable:$true] %s614
          %s616 = sshll.u32 %s612, 4
          %s617 = int_to_ptr.hbm [resolvable:$true] %s616
          %619 = dma.vmem_to_hbm [thread:$0]  %s615, 256, %s617, %s601
        $region44: #{tpu_custom_call.1} parent=35 // pred_fallthru
          _
      $region36: #{tpu_custom_call.1} parent=5 // pred_fallthru
        _
      %p620 = scmp.le.s32.totalorder 2, %s16
      // Predicated region
      $region45: #{tpu_custom_call.1} parent=5 // pred_check
        %p621 = pneg %p620
      $region46: #{tpu_custom_call.1} parent=5 // pred_check_branch
        %623 = sbr.rel (%p621) target = $region48
      $region47: #{tpu_custom_call.1} parent=5 // pred_region
        %s624 = ssub.s32 %s16, 2
        // Predicated region
        $region49: #{tpu_custom_call.1} parent=47 // pred_check
          %p625 = pneg %p134
        $region50: #{tpu_custom_call.1} parent=47 // pred_check_branch
          %627 = sbr.rel (%p625) target = $region52
        $region51: #{tpu_custom_call.1} parent=47 // pred_region
          %s628 = sand.u32 %s119, 1
          %s629 = scalar_lea.sflag [#allocation4], %s628
          %s630 = sand.u32 %s119, 1
          %s631 = smul.addr %s630, 16
          %s632 = scalar_lea.vmem [#allocation5], %s631
          %634 = dma.done %s629, 256
        $region52: #{tpu_custom_call.1} parent=47 // pred_fallthru
          _
      $region48: #{tpu_custom_call.1} parent=5 // pred_fallthru
        _
    $region6: #{tpu_custom_call.1} parent=1 // loop_footer
      %s20 = sadd.s32 1, %s16
    $region7: #{tpu_custom_call.1} parent=1 // loop_footer_branch
      %15 = sbr.rel target = $region3
    $region8: #{tpu_custom_call.1} parent=1 // loop_exit
      _
    %635 = vsyncpa [#allocation3], 1
    %s636 = scalar_lea.sflag [#allocation3], 1
    %637 = vsyncpa %s636, 1
    %638 = vsyncpa [#allocation4], 1
    %s639 = scalar_lea.sflag [#allocation4], 1
    %640 = vsyncpa %s639, 1

</llo_original>
